<compile_context>
chip_gen: v6e
topology: v6e:2x2x1
jax: 0.10.0
libtpu: 0.0.40
codegen_flags: <defaults>
</compile_context>

<pallas_src>
import jax
import jax.numpy as jnp
from jax.experimental import pallas as pl
from jax.experimental.pallas import tpu as pltpu


# ---------------------------------------------------------------------------
# StackDelta as a Pallas kernel: [B, T, F] -> [B, 3, T, F//3]
# (the requires_grad / in-place transpose_ branch of the torch module is a
#  no-op distinction in JAX: both branches produce the same value)
# ---------------------------------------------------------------------------
def _stack_delta_kernel(x_ref, o_ref):
    x = x_ref[0]                        # [T, F]
    D = o_ref.shape[3]
    for c in range(3):                  # channel c is a static lane slice of the input
        o_ref[0, c] = x[:, c * D:(c + 1) * D]


def stack_delta(x):
    B, T, F = x.shape
    assert F % 3 == 0
    D = F // 3
    return pl.pallas_call(
        _stack_delta_kernel,
        out_shape=jax.ShapeDtypeStruct((B, 3, T, D), x.dtype),
        grid=(B,),
        in_specs=[pl.BlockSpec((1, T, F), lambda b: (b, 0, 0))],
        out_specs=pl.BlockSpec((1, 3, T, D), lambda b: (b, 0, 0, 0)),
        compiler_params=pltpu.CompilerParams(dimension_semantics=("parallel",)),
    )(x)


# ---------------------------------------------------------------------------
# Helper matrices that turn the 3x3 stride-2 conv into plain MXU matmuls.
# All of these are tiny, built once from the weights in the wrapper, and stay
# VMEM-resident (constant index_map) for every grid step.
# ---------------------------------------------------------------------------
def _row_select(Ho, Hin):
    """S[kh, i, t] = 1 iff t == 2*i + kh.  Rows hitting the bottom zero-pad row
    (index == Hin) become all-zero rows, i.e. the pad is encoded in S."""
    i = jnp.arange(Ho)[:, None]
    t = jnp.arange(Hin)[None, :]
    return jnp.stack([(t == (2 * i + kh)).astype(jnp.float32) for kh in range(3)], axis=0)


def _layer1_weight_mat(w, Win, Wo):
    """w: [Cout, Cin, 3, 3] -> M[ci, kh, win, co*Wo + j] = w[co, ci, kh, win - 2j]
    (0 outside the 3-tap window; right zero-pad column encoded implicitly)."""
    Cout, Cin = w.shape[0], w.shape[1]
    win = jnp.arange(Win)[:, None]
    j = jnp.arange(Wo)[None, :]
    kw = win - 2 * j
    valid = (kw >= 0) & (kw <= 2)
    kw_c = jnp.clip(kw, 0, 2)
    wt = jnp.transpose(w, (1, 2, 0, 3))            # [Cin, 3, Cout, 3]
    m = wt[:, :, :, kw_c]                          # [Cin, 3, Cout, Win, Wo]
    m = jnp.where(valid[None, None, None], m, 0.0)
    m = jnp.transpose(m, (0, 1, 3, 2, 4))          # [Cin, 3, Win, Cout, Wo]
    return m.reshape(Cin, 3, Win, Cout * Wo)


def _layer2_weight_mat(w, Win, Wo):
    """w: [Cout2, Cout1, 3, 3] -> M[kh, c1*Win + win, c2*Wo + j] = w[c2, c1, kh, win - 2j]
    matching the (c1, w) lane layout of the in-VMEM h1 slab."""
    Cout2, Cout1 = w.shape[0], w.shape[1]
    win = jnp.arange(Win)[:, None]
    j = jnp.arange(Wo)[None, :]
    kw = win - 2 * j
    valid = (kw >= 0) & (kw <= 2)
    kw_c = jnp.clip(kw, 0, 2)
    wt = jnp.transpose(w, (2, 1, 0, 3))            # [3, Cout1, Cout2, 3]
    m = wt[:, :, :, kw_c]                          # [3, Cout1, Cout2, Win, Wo]
    m = jnp.where(valid[None, None, None], m, 0.0)
    m = jnp.transpose(m, (0, 1, 3, 2, 4))          # [3, Cout1, Win, Cout2, Wo]
    return m.reshape(3, Cout1 * Win, Cout2 * Wo)


# ---------------------------------------------------------------------------
# Fused Pallas kernel: StackDelta slicing + conv1 + ReLU + conv2 + ReLU + final
# (B, NT, OD*ND) layout, all in VMEM for one batch element per grid step.
# ---------------------------------------------------------------------------
def _fused_subsample_kernel(x_ref, s1_ref, m1_ref, b1e_ref, s2_ref, m2_ref, b2e_ref, o_ref):
    x = x_ref[0]                                   # [T, F]
    D = m1_ref.shape[2]
    H1, N1 = s1_ref.shape[1], m1_ref.shape[3]

    # ---- layer 1: pad(0,1,0,1) + conv3x3 s2 + ReLU ----
    acc1 = jnp.zeros((H1, N1), jnp.float32)
    for ci in range(3):                            # StackDelta channel = lane slice of x
        xc = x[:, ci * D:(ci + 1) * D]             # [T, D]
        for kh in range(3):
            rows = jnp.dot(s1_ref[kh], xc,
                           preferred_element_type=jnp.float32)          # [H1, D]
            acc1 = acc1 + jnp.dot(rows, m1_ref[ci, kh],
                                  preferred_element_type=jnp.float32)   # [H1, M*W1]
    h1 = jnp.maximum(acc1 + b1e_ref[...], 0.0)     # stays in VMEM, lane layout (co, w)

    # ---- layer 2: pad(0,1,0,1) + conv3x3 s2 + ReLU ----
    H2, N2 = s2_ref.shape[1], m2_ref.shape[2]
    acc2 = jnp.zeros((H2, N2), jnp.float32)
    for kh in range(3):
        rows2 = jnp.dot(s2_ref[kh], h1,
                        preferred_element_type=jnp.float32)             # [H2, M*W1]
        acc2 = acc2 + jnp.dot(rows2, m2_ref[kh],
                              preferred_element_type=jnp.float32)       # [H2, M*W2]

    # final layout (t, od*ND + nd) == torch's permute(0,2,1,3).reshape(B, NT, OD*ND)
    o_ref[0] = jnp.maximum(acc2 + b2e_ref[...], 0.0).astype(o_ref.dtype)


def conv2d_subsampling_forward(x, lens, params):
    B, T, F = x.shape
    assert F % 3 == 0
    D = F // 3
    M = params["w1"].shape[0]

    H1 = (T - 2) // 2 + 1        # conv output sizes with ConstantPad2d((0,1,0,1))
    W1 = (D - 2) // 2 + 1
    H2 = (H1 - 2) // 2 + 1
    W2 = (W1 - 2) // 2 + 1
    N1 = M * W1
    N2 = M * W2

    S1 = _row_select(H1, T)                                  # (3, H1, T)
    M1 = _layer1_weight_mat(params["w1"], D, W1)             # (3, 3, D, N1)
    b1e = jnp.repeat(params["b1"], W1)[None, :]              # (1, N1)
    S2 = _row_select(H2, H1)                                 # (3, H2, H1)
    M2 = _layer2_weight_mat(params["w2"], W1, W2)            # (3, N1, N2)
    b2e = jnp.repeat(params["b2"], W2)[None, :]              # (1, N2)

    flops = 2 * B * (9 * (H1 * T * D + H1 * D * N1) + 3 * (H2 * H1 * N1 + H2 * N1 * N2))
    bytes_accessed = 4 * (x.size + B * H2 * N2 + S1.size + M1.size + S2.size + M2.size + N1 + N2)

    out = pl.pallas_call(
        _fused_subsample_kernel,
        out_shape=jax.ShapeDtypeStruct((B, H2, N2), jnp.float32),
        grid=(B,),
        in_specs=[
            pl.BlockSpec((1, T, F), lambda b: (b, 0, 0)),           # per-batch input rows
            pl.BlockSpec((3, H1, T), lambda b: (0, 0, 0)),          # VMEM-resident helpers
            pl.BlockSpec((3, 3, D, N1), lambda b: (0, 0, 0, 0)),
            pl.BlockSpec((1, N1), lambda b: (0, 0)),
            pl.BlockSpec((3, H2, H1), lambda b: (0, 0, 0)),
            pl.BlockSpec((3, N1, N2), lambda b: (0, 0, 0)),
            pl.BlockSpec((1, N2), lambda b: (0, 0)),
        ],
        out_specs=pl.BlockSpec((1, H2, N2), lambda b: (b, 0, 0)),   # lane-dense final slab
        compiler_params=pltpu.CompilerParams(
            dimension_semantics=("parallel",),        # shards batch tiles across TCs on v7x
            vmem_limit_bytes=32 * 1024 * 1024,        # safe on v7x's 64 MiB physical VMEM
        ),
        cost_estimate=pl.CostEstimate(flops=flops, transcendentals=0,
                                      bytes_accessed=bytes_accessed),
    )(x, S1, M1, b1e, S2, M2, b2e)

    lens_out = (lens // 2) // 2       # torch.div(..., 2, rounding_mode='floor') twice
    return out, lens_out


def init_params(key, multiplier, idim=3):
    k1, k2, k3, k4 = jax.random.split(key, 4)
    fan1 = float(idim * 9)
    fan2 = float(multiplier * 9)
    w1 = jax.random.uniform(k1, (multiplier, idim, 3, 3), jnp.float32, -1.0, 1.0) / jnp.sqrt(fan1)
    b1 = jax.random.uniform(k2, (multiplier,), jnp.float32, -1.0, 1.0) / jnp.sqrt(fan1)
    w2 = jax.random.uniform(k3, (multiplier, multiplier, 3, 3), jnp.float32, -1.0, 1.0) / jnp.sqrt(fan2)
    b2 = jax.random.uniform(k4, (multiplier,), jnp.float32, -1.0, 1.0) / jnp.sqrt(fan2)
    return dict(w1=w1, b1=b1, w2=w2, b2=b2)


# pure-JAX reference for correctness check
def _ref_forward(x, lens, params):
    B, T, F = x.shape
    xs = jnp.transpose(x.reshape(B, T, 3, F // 3), (0, 2, 1, 3))

    def conv(h, w, b):
        hp = jnp.pad(h, ((0, 0), (0, 0), (0, 1), (0, 1)))
        y = jax.lax.conv_general_dilated(
            hp, w, window_strides=(2, 2), padding="VALID",
            dimension_numbers=("NCHW", "OIHW", "NCHW"))
        return jnp.maximum(y + b[None, :, None, None], 0.0)

    h2 = conv(conv(xs, params["w1"], params["b1"]), params["w2"], params["b2"])
    B_, OD, NT, ND = h2.shape
    out = jnp.transpose(h2, (0, 2, 1, 3)).reshape(B_, NT, OD * ND)
    return out, (lens // 2) // 2


if __name__ == "__main__":
    key = jax.random.PRNGKey(0)
    kx, kp = jax.random.split(key)

    B, T, F = 2, 16, 12           # small shapes; F divisible by 3 (StackDelta)
    multiplier = 4

    x = jax.random.normal(kx, (B, T, F), dtype=jnp.float32)
    lens = jnp.array([16, 13], dtype=jnp.int32)
    params = init_params(kp, multiplier)

    # 1) StackDelta module itself (the spec): [B, T, F] -> [B, 3, T, F//3]
    sd = jax.block_until_ready(stack_delta(x))
    sd_ref = jnp.transpose(x.reshape(B, T, 3, F // 3), (0, 2, 1, 3))
    assert sd.shape == sd_ref.shape, (sd.shape, sd_ref.shape)
    assert jnp.array_equal(sd, sd_ref)

    # 2) fused Conv2dSubdampling(stacksup=True) path built on StackDelta
    out, lens_out = conv2d_subsampling_forward(x, lens, params)
    out = jax.block_until_ready(out)
    lens_out = jax.block_until_ready(lens_out)

    ref_out, ref_lens = _ref_forward(x, lens, params)
    assert out.shape == ref_out.shape, (out.shape, ref_out.shape)
    # generous tolerance: TPU default f32 matmul precision (bf16 passes) in both paths
    assert jnp.allclose(out, ref_out, rtol=3e-2, atol=3e-2)
    assert jnp.array_equal(lens_out, ref_lens)

    print("KERNEL_OK")
</pallas_src>

<mosaic_0001>
module attributes {stable_mosaic.version = 11 : i64} {
  func.func @_stack_delta_kernel(%arg0: i32, %arg1: memref<1x16x12xf32, #tpu.memory_space<vmem>>, %arg2: memref<1x3x16x4xf32, #tpu.memory_space<vmem>>) attributes {dimension_semantics = [#tpu.dimension_semantics<parallel>], iteration_bounds = array<i64: 2>, scalar_prefetch = 0 : i64, scratch_operands = 0 : i64, tpu.core_type = #tpu.core_type<tc>, window_params = [{transform_indices = @transform_0, window_bounds = array<i64: 1, 16, 12>}, {transform_indices = @transform_1, window_bounds = array<i64: 1, 3, 16, 4>}]} {
    %c0 = arith.constant 0 : index
    %c0_0 = arith.constant 0 : index
    %c0_1 = arith.constant 0 : index
    %0 = vector.load %arg1[%c0, %c0_0, %c0_1] : memref<1x16x12xf32, #tpu.memory_space<vmem>>, vector<1x16x12xf32>
    %1 = vector.shape_cast %0 : vector<1x16x12xf32> to vector<16x12xf32>
    %2 = vector.extract_strided_slice %1 {offsets = [0, 0], sizes = [16, 4], strides = [1, 1]} : vector<16x12xf32> to vector<16x4xf32>
    %c0_2 = arith.constant 0 : index
    %c0_3 = arith.constant 0 : index
    %c0_4 = arith.constant 0 : index
    %c0_5 = arith.constant 0 : index
    %3 = vector.load %arg2[%c0_2, %c0_3, %c0_4, %c0_5] : memref<1x3x16x4xf32, #tpu.memory_space<vmem>>, vector<1x1x16x4xf32>
    %4 = vector.shape_cast %3 : vector<1x1x16x4xf32> to vector<16x4xf32>
    %5 = vector.shape_cast %2 : vector<16x4xf32> to vector<1x1x16x4xf32>
    tpu.vector_store %arg2[%c0_2, %c0_3, %c0_4, %c0_5], %5 {strides = array<i32>} : memref<1x3x16x4xf32, #tpu.memory_space<vmem>>, vector<1x1x16x4xf32>,
    %6 = vector.extract_strided_slice %1 {offsets = [0, 4], sizes = [16, 4], strides = [1, 1]} : vector<16x12xf32> to vector<16x4xf32>
    %c0_6 = arith.constant 0 : index
    %c1 = arith.constant 1 : index
    %c0_7 = arith.constant 0 : index
    %c0_8 = arith.constant 0 : index
    %7 = vector.load %arg2[%c0_6, %c1, %c0_7, %c0_8] : memref<1x3x16x4xf32, #tpu.memory_space<vmem>>, vector<1x1x16x4xf32>
    %8 = vector.shape_cast %7 : vector<1x1x16x4xf32> to vector<16x4xf32>
    %9 = vector.shape_cast %6 : vector<16x4xf32> to vector<1x1x16x4xf32>
    tpu.vector_store %arg2[%c0_6, %c1, %c0_7, %c0_8], %9 {strides = array<i32>} : memref<1x3x16x4xf32, #tpu.memory_space<vmem>>, vector<1x1x16x4xf32>,
    %10 = vector.extract_strided_slice %1 {offsets = [0, 8], sizes = [16, 4], strides = [1, 1]} : vector<16x12xf32> to vector<16x4xf32>
    %c0_9 = arith.constant 0 : index
    %c2 = arith.constant 2 : index
    %c0_10 = arith.constant 0 : index
    %c0_11 = arith.constant 0 : index
    %11 = vector.load %arg2[%c0_9, %c2, %c0_10, %c0_11] : memref<1x3x16x4xf32, #tpu.memory_space<vmem>>, vector<1x1x16x4xf32>
    %12 = vector.shape_cast %11 : vector<1x1x16x4xf32> to vector<16x4xf32>
    %13 = vector.shape_cast %10 : vector<16x4xf32> to vector<1x1x16x4xf32>
    tpu.vector_store %arg2[%c0_9, %c2, %c0_10, %c0_11], %13 {strides = array<i32>} : memref<1x3x16x4xf32, #tpu.memory_space<vmem>>, vector<1x1x16x4xf32>,
    return
  }
  func.func @transform_0(%arg0: i32) -> (i32, i32, i32) {
    %c0_i32 = arith.constant 0 : i32
    %c0_i32_0 = arith.constant 0 : i32
    %c0_i32_1 = arith.constant 0 : i32
    return %arg0, %c0_i32, %c0_i32_0 : i32, i32, i32
  }
  func.func @transform_1(%arg0: i32) -> (i32, i32, i32, i32) {
    %c0_i32 = arith.constant 0 : i32
    %c0_i32_0 = arith.constant 0 : i32
    %c0_i32_1 = arith.constant 0 : i32
    %c0_i32_2 = arith.constant 0 : i32
    return %arg0, %c0_i32, %c0_i32_0, %c0_i32_1 : i32, i32, i32, i32
  }
}

</mosaic_0001>

<llo_original>
// kernel: tpu_custom_call.1
$region0: #{tpu_custom_call.1}
  #allocation0 [shape = 'u32[]', space=smem, size = 0x4, offset = 0x4, fixed_abs, tag = 'smem constant byte address 0x4 - core index']
  #allocation1 [shape = 'u32[144,128]{1,0:T(1,128)}', space=vmem, size = 0x12000, scoped, tag = 'internal scratch']
  %s0 = inlined_call_operand.vmem [shape: f32[2,16,12], index: 0, kind: input, shape index: {}]
  %s1 = inlined_call_operand.vmem [shape: f32[2,3,16,4], index: 1, kind: output, shape index: {}]
  %s2 = sld [smem:[#allocation0]]
  $region37: #{tpu_custom_call.1} parent=0
    _
  %s4 = ssub.s32 1, %s2
  %s5 = scalar_select 0, %s4, %s2
  loop: start=0, step=1, limit=4
  $region2: #{tpu_custom_call.1} parent=0 // loop_pre_header
    _
  $region3: #{tpu_custom_call.1} parent=0 // loop_header
    %s7 = sphi 0, %s11
    %p8 = scmp.ge.s32.totalorder %s7, 4
    %s17 = sphi 0, %s19
    %s20 = sphi 0, %s17
    %s21 = sphi 0, %s20
    %s37 = sphi 0, %s21
    %s43 = sphi 0, %s45
    %s46 = sphi 0, %s43
    %s47 = sphi 0, %s46
    %s63 = sphi 0, %s47
  $region4: #{tpu_custom_call.1} parent=0 // loop_header_branch
    %10 = sbr.rel (%p8) target = $region8
  $region5: #{tpu_custom_call.1} parent=0 // loop_body
    %s12 = ssub.s32 %s7, 1
    %s13 = ssub.s32 %s7, 2
    %s14 = sadd.s32 %s7, 1
    %s15 = ssub.s32 %s7, %s14
    %p16 = scmp.eq.s32.totalorder %s15, 0
    %s18 = sadd.s32 %s17, 1
    %s19 = scalar_select %p16, %s17, %s18
    %p22 = pneg %p16
    %p23 = scmp.eq.s32.totalorder %s7, 1
    %p24 = por %p22, %p23
    %p25 = scmp.ne.s32.totalorder %s17, %s20
    %p26 = scmp.eq.s32.totalorder %s7, 0
    %p27 = por %p25, %p26
    %p28 = scmp.ne.s32.totalorder %s17, %s20
    %p29 = scmp.eq.s32.totalorder %s12, 1
    %p30 = por %p28, %p29
    %p31 = scmp.ne.s32.totalorder %s20, %s21
    %p32 = scmp.eq.s32.totalorder %s12, 0
    %p33 = por %p31, %p32
    %p34 = scmp.ne.s32.totalorder %s20, %s21
    %p35 = scmp.eq.s32.totalorder %s13, 1
    %p36 = por %p34, %p35
    %p38 = scmp.ne.s32.totalorder %s21, %s37
    %p39 = scmp.eq.s32.totalorder %s13, 0
    %p40 = por %p38, %p39
    %s41 = ssub.s32 %s7, %s14
    %p42 = scmp.eq.s32.totalorder %s41, 0
    %s44 = sadd.s32 %s43, 1
    %s45 = scalar_select %p42, %s43, %s44
    %p48 = pneg %p42
    %p49 = scmp.eq.s32.totalorder %s7, 1
    %p50 = por %p48, %p49
    %p51 = scmp.ne.s32.totalorder %s43, %s46
    %p52 = scmp.eq.s32.totalorder %s7, 0
    %p53 = por %p51, %p52
    %p54 = scmp.ne.s32.totalorder %s43, %s46
    %p55 = scmp.eq.s32.totalorder %s12, 1
    %p56 = por %p54, %p55
    %p57 = scmp.ne.s32.totalorder %s46, %s47
    %p58 = scmp.eq.s32.totalorder %s12, 0
    %p59 = por %p57, %p58
    %p60 = scmp.ne.s32.totalorder %s46, %s47
    %p61 = scmp.eq.s32.totalorder %s13, 1
    %p62 = por %p60, %p61
    %p64 = scmp.ne.s32.totalorder %s47, %s63
    %p65 = scmp.eq.s32.totalorder %s13, 0
    %p66 = por %p64, %p65
    %p67 = scmp.le.s32.totalorder 1, %s7
    %p68 = scmp.lt.s32.totalorder %s7, 3
    %p69 = pnand %p67, %p68
    %p70 = pneg %p69
    // Predicated region
    $region9: #{tpu_custom_call.1} parent=5 // pred_check
      _
    $region10: #{tpu_custom_call.1} parent=5 // pred_check_branch
      %72 = sbr.rel (%p69) target = $region12
    $region11: #{tpu_custom_call.1} parent=5 // pred_region
      %s73 = ssub.s32 %s7, 1
    $region12: #{tpu_custom_call.1} parent=5 // pred_fallthru
      _
    %p74 = scmp.lt.s32.totalorder %s7, 2
    // Predicated region
    $region13: #{tpu_custom_call.1} parent=5 // pred_check
      %p75 = pneg %p74
    $region14: #{tpu_custom_call.1} parent=5 // pred_check_branch
      %77 = sbr.rel (%p75) target = $region16
    $region15: #{tpu_custom_call.1} parent=5 // pred_region
      // Predicated region
      $region17: #{tpu_custom_call.1} parent=15 // pred_check
        %p78 = pneg %p27
      $region18: #{tpu_custom_call.1} parent=15 // pred_check_branch
        %80 = sbr.rel (%p78) target = $region20
      $region19: #{tpu_custom_call.1} parent=15 // pred_region
        %p81 = scmp.lt.s32.totalorder %s7, 1
        %s82 = scalar_select %p81, %s7, 1
        %s83 = smul.addr %s82, 2
        %s84 = smul.addr %s83, 8
        %s85 = scalar_lea.vmem %s0, %s84
      $region20: #{tpu_custom_call.1} parent=15 // pred_fallthru
        _
    $region16: #{tpu_custom_call.1} parent=5 // pred_fallthru
      _
    %p86 = scmp.le.s32.totalorder 1, %s7
    %p87 = scmp.lt.s32.totalorder %s7, 3
    %p88 = pnand %p86, %p87
    %p89 = pneg %p88
    // Predicated region
    $region21: #{tpu_custom_call.1} parent=5 // pred_check
      _
    $region22: #{tpu_custom_call.1} parent=5 // pred_check_branch
      %91 = sbr.rel (%p88) target = $region24
    $region23: #{tpu_custom_call.1} parent=5 // pred_region
      %s92 = ssub.s32 %s7, 1
      %p93 = scmp.lt.s32.totalorder %s12, 1
      %s94 = scalar_select %p93, %s12, 1
      %s95 = smul.addr %s94, 2
      %s96 = smul.addr %s95, 8
      %s97 = scalar_lea.vmem %s0, %s96
      %p98 = pneg %p33
      %p99 = pneg %p30
      %p100 = pneg %p59
      %p101 = pneg %p56
      %p102 = scmp.lt.s32.totalorder %s12, 1
      %s103 = scalar_select %p102, %s12, 1
      %s104 = smul.addr %s103, 6
      %s105 = smul.addr %s104, 8
      %s106 = scalar_lea.vmem %s1, %s105
      %p107 = scmp.lt.s32.totalorder %s12, 1
      %s108 = scalar_select %p107, %s12, 1
      %s109 = smul.addr %s108, 2
      %s110 = smul.addr %s109, 8
      %s111 = scalar_lea.vmem %s0, %s110
      %p112 = scmp.lt.s32.totalorder %s12, 1
      %s113 = scalar_select %p112, %s12, 1
      %s114 = smul.addr %s113, 6
      %s115 = smul.addr %s114, 8
      %s116 = scalar_lea.vmem %s1, %s115
      %v117 = vld [vmem:[%s111] sm:$0xff]
      %v118 = vld [vmem:[%s111 + $0x8] sm:$0xff]
      %vm119 = vcmask 31744
      %120 = vst.msk [vmem:[%s116] sm:$0xff] %vm119, %v117
      %121 = vst.msk [vmem:[%s116 + $0x8] sm:$0xff] %vm119, %v118
      %124 = vrot.lane.b32.xlu0 %v117, 124
      %v125 = vpop.permute.xlu0 %124
      %126 = vrot.lane.b32.xlu0 %v118, 124
      %v127 = vpop.permute.xlu0 %126
      %s130 = scalar_lea.vmem %s116, 16
      %131 = vst.msk [vmem:[%s130] sm:$0xff] %vm119, %v125
      %132 = vst.msk [vmem:[%s130 + $0x8] sm:$0xff] %vm119, %v127
      %133 = vrot.lane.b32.xlu0 %v117, 120
      %v134 = vpop.permute.xlu0 %133
      %135 = vrot.lane.b32.xlu0 %v118, 120
      %v136 = vpop.permute.xlu0 %135
      %s139 = scalar_lea.vmem %s116, 32
      %140 = vst.msk [vmem:[%s139] sm:$0xff] %vm119, %v134
      %141 = vst.msk [vmem:[%s139 + $0x8] sm:$0xff] %vm119, %v136
      %p142 = scmp.lt.s32.totalorder %s12, 1
      %s143 = scalar_select %p142, %s12, 1
      %s144 = smul.addr %s143, 6
      %s145 = smul.addr %s144, 8
      %s146 = scalar_lea.vmem %s1, %s145
      // Predicated region
      $region25: #{tpu_custom_call.1} parent=23 // pred_check
        %p147 = pneg %p56
      $region26: #{tpu_custom_call.1} parent=23 // pred_check_branch
        %149 = sbr.rel (%p147) target = $region28
      $region27: #{tpu_custom_call.1} parent=23 // pred_region
        _
      $region28: #{tpu_custom_call.1} parent=23 // pred_fallthru
        _
    $region24: #{tpu_custom_call.1} parent=5 // pred_fallthru
      _
    %p150 = scmp.le.s32.totalorder 2, %s7
    // Predicated region
    $region29: #{tpu_custom_call.1} parent=5 // pred_check
      %p151 = pneg %p150
    $region30: #{tpu_custom_call.1} parent=5 // pred_check_branch
      %153 = sbr.rel (%p151) target = $region32
    $region31: #{tpu_custom_call.1} parent=5 // pred_region
      %s154 = ssub.s32 %s7, 2
      // Predicated region
      $region33: #{tpu_custom_call.1} parent=31 // pred_check
        %p155 = pneg %p62
      $region34: #{tpu_custom_call.1} parent=31 // pred_check_branch
        %157 = sbr.rel (%p155) target = $region36
      $region35: #{tpu_custom_call.1} parent=31 // pred_region
        %p158 = scmp.lt.s32.totalorder %s13, 1
        %s159 = scalar_select %p158, %s13, 1
        %s160 = smul.addr %s159, 6
        %s161 = smul.addr %s160, 8
        %s162 = scalar_lea.vmem %s1, %s161
      $region36: #{tpu_custom_call.1} parent=31 // pred_fallthru
        _
    $region32: #{tpu_custom_call.1} parent=5 // pred_fallthru
      _
  $region6: #{tpu_custom_call.1} parent=0 // loop_footer
    %s11 = sadd.s32 1, %s7
  $region7: #{tpu_custom_call.1} parent=0 // loop_footer_branch
    %6 = sbr.rel target = $region3
  $region8: #{tpu_custom_call.1} parent=0 // loop_exit
    _

</llo_original>
